<compile_context>
chip_gen: v7x
topology: tpu7x:2x2x1
jax: 0.10.0
libtpu: 0.0.40
codegen_flags: <defaults>
</compile_context>

<pallas_src>
import functools

import jax
import jax.numpy as jnp
from jax import lax
from jax.experimental import pallas as pl
from jax.experimental.pallas import tpu as pltpu


def _round_up(x, m):
    return ((x + m - 1) // m) * m


def _cdiv(a, b):
    return (a + b - 1) // b


def _vmem_capacity_bytes():
    """Physical VMEM per TensorCore (128 MiB v4/v5e/v6e, 64 MiB v7x)."""
    try:
        cap = int(getattr(pltpu.get_tpu_info(), "vmem_capacity_bytes", 0))
        if cap > 0:
            return cap
    except Exception:
        pass
    try:
        kind = jax.devices()[0].device_kind.lower()
        if any(g in kind for g in ("v4", "v5", "v6")):
            return 128 * 1024 * 1024
    except Exception:
        pass
    return 64 * 1024 * 1024            # conservative (v7x per-TC)


def _pick_chunk(total, cand_max):
    """Largest 128-multiple <= cand_max that minimizes padding of `total` (prefers divisors)."""
    best, best_waste = 128, None
    c = max(128, (cand_max // 128) * 128)
    while c >= 128:
        waste = (-total) % c
        if best_waste is None or waste < best_waste:
            best, best_waste = c, waste
            if waste == 0:
                break
        c -= 128
    return best


def _sigmoid(z):
    # Exact sigmoid with a single EUP transcendental: sigmoid(z) = 0.5*tanh(z/2) + 0.5.
    return 0.5 * jnp.tanh(0.5 * z) + 0.5


def _mlp_kernel_single(x_ref, w1_ref, w2_ref, o_ref):
    # Whole d_ff fits a single chunk: no accumulator scratch, no revisit passes.
    z1 = lax.dot_general(
        x_ref[...], w1_ref[...],
        dimension_numbers=(((1,), (1,)), ((), ())),
        preferred_element_type=jnp.float32)
    h = _sigmoid(z1).astype(jnp.bfloat16)
    z2 = lax.dot_general(
        h, w2_ref[...],
        dimension_numbers=(((1,), (1,)), ((), ())),
        preferred_element_type=jnp.float32)
    o_ref[...] = _sigmoid(z2).astype(o_ref.dtype)


def _mlp_kernel_chunked(x_ref, w1_ref, w2_ref, o_ref, acc_ref):
    # x_ref : (tm,  E)  bf16   activations tile
    # w1_ref: (tff, E)  bf16   EMB2FF chunk, native (out, in) layout
    # w2_ref: (E, tff)  bf16   FF2EMB chunk, native (out, in) layout
    # o_ref : (tm,  E)  bf16   output tile
    # acc   : (tm,  E)  f32    second-matmul accumulator over the d_ff axis
    j = pl.program_id(1)

    z1 = lax.dot_general(
        x_ref[...], w1_ref[...],
        dimension_numbers=(((1,), (1,)), ((), ())),
        preferred_element_type=jnp.float32)
    h = _sigmoid(z1).astype(jnp.bfloat16)
    partial = lax.dot_general(
        h, w2_ref[...],
        dimension_numbers=(((1,), (1,)), ((), ())),
        preferred_element_type=jnp.float32)

    @pl.when(j == 0)
    def _():
        acc_ref[...] = partial            # first chunk: write, no zero-init + add pass

    @pl.when(j != 0)
    def _():
        acc_ref[...] += partial

    @pl.when(j == pl.num_programs(1) - 1)
    def _():
        o_ref[...] = _sigmoid(acc_ref[...]).astype(o_ref.dtype)


def _pad2(a, rows, cols):
    pr, pc = rows - a.shape[0], cols - a.shape[1]
    if pr == 0 and pc == 0:
        return a
    return jnp.pad(a, ((0, pr), (0, pc)))


@functools.partial(jax.jit, static_argnames=("tm", "tff"))
def layer_forward(x, w_emb2ff, w_ff2emb, *, tm=None, tff=None):
    """x: (B, S, d_emb); w_emb2ff: (d_ff, d_emb); w_ff2emb: (d_emb, d_ff) (torch layouts).

    Equivalent to: sigmoid(sigmoid(x @ w_emb2ff.T) @ w_ff2emb.T), all bf16 I/O.
    """
    B, S, d_emb = x.shape
    d_ff = w_emb2ff.shape[0]
    assert w_emb2ff.shape == (d_ff, d_emb)
    assert w_ff2emb.shape == (d_emb, d_ff)

    M = B * S
    E = _round_up(d_emb, 128)            # lane-dense activation / output width
    F0 = _round_up(d_ff, 128)

    vmem_cap = _vmem_capacity_bytes()
    vmem_limit = int(vmem_cap * 0.75)    # 96 MiB on v5e/v6e, 48 MiB on v7x

    # --- d_ff chunk: largest 128-multiple whose 2x double-buffered weight blocks fit
    #     ~half of the VMEM limit, preferring a chunk that divides the padded d_ff ---
    if tff is None:
        weight_budget = vmem_limit // 2
        tff_max = max(128, min(F0, (weight_budget // (8 * E)) // 128 * 128))
        tff = _pick_chunk(F0, tff_max)
    tff = max(128, min(_round_up(tff, 128), F0))
    n_ff = _cdiv(F0, tff)
    F = n_ff * tff

    # --- token tile: as large as the remaining VMEM allows (less weight re-streaming).
    #     Per-row cost: x/out double-buffered bf16 (8E) + f32 acc (4E) + z1 f32 / h bf16 (6*tff).
    if tm is None:
        margin = 4 * 1024 * 1024
        remaining = vmem_limit - 8 * tff * E - margin
        per_row = 12 * E + 6 * tff
        tm = max(16, (remaining // per_row) // 16 * 16)
        tm = min(tm, 2048)
    tm = max(16, min(tm, _round_up(M, 16)))          # bf16 sublane packing: multiple of 16
    n_m = _cdiv(M, tm)
    Mp = n_m * tm

    # Zero padding is mathematically inert: padded d_emb/d_ff weight columns are zero, so the
    # junk sigmoid(0)=0.5 hidden columns multiply zero weights; padded M rows are sliced off.
    x2 = _pad2(x.reshape(M, d_emb).astype(jnp.bfloat16), Mp, E)
    # TODO(synk): in a real model, pad/cast the weights once at parameter-load time (and keep
    # them resident) instead of re-padding on every forward call.
    w1 = _pad2(w_emb2ff.astype(jnp.bfloat16), F, E)   # (d_ff, d_emb) native layout
    w2 = _pad2(w_ff2emb.astype(jnp.bfloat16), E, F)   # (d_emb, d_ff) native layout

    cost = pl.CostEstimate(
        flops=4 * Mp * E * F,                         # two matmuls, 2*M*K*N each
        transcendentals=Mp * (F + E),                 # one tanh per sigmoid element
        bytes_accessed=(2 * Mp * E * 2                # x read + out write (bf16)
                        + n_m * 2 * E * F * 2),       # W1+W2 streamed once per M tile
    )

    # TODO(synk): on v7x, dimension_semantics=(pltpu.CORE_PARALLEL, pltpu.ARBITRARY) can shard
    # the M axis across the 2 TensorCores; kept as "parallel" here for cross-generation safety.
    if n_ff == 1:
        out = pl.pallas_call(
            _mlp_kernel_single,
            out_shape=jax.ShapeDtypeStruct((Mp, E), jnp.bfloat16),
            grid_spec=pltpu.PrefetchScalarGridSpec(
                num_scalar_prefetch=0,
                grid=(n_m,),
                in_specs=[
                    pl.BlockSpec((tm, E), lambda i: (i, 0)),
                    pl.BlockSpec((F, E), lambda i: (0, 0)),    # full W1 (native layout)
                    pl.BlockSpec((E, F), lambda i: (0, 0)),    # full W2 (native layout)
                ],
                out_specs=pl.BlockSpec((tm, E), lambda i: (i, 0)),
            ),
            compiler_params=pltpu.CompilerParams(
                dimension_semantics=("parallel",),
                vmem_limit_bytes=vmem_limit,
            ),
            cost_estimate=cost,
        )(x2, w1, w2)
    else:
        out = pl.pallas_call(
            _mlp_kernel_chunked,
            out_shape=jax.ShapeDtypeStruct((Mp, E), jnp.bfloat16),
            grid_spec=pltpu.PrefetchScalarGridSpec(
                num_scalar_prefetch=0,
                grid=(n_m, n_ff),                              # reduction (d_ff) axis last
                in_specs=[
                    pl.BlockSpec((tm, E), lambda i, j: (i, 0)),
                    pl.BlockSpec((tff, E), lambda i, j: (j, 0)),   # W1 chunk (native layout)
                    pl.BlockSpec((E, tff), lambda i, j: (0, j)),   # W2 chunk (native layout)
                ],
                out_specs=pl.BlockSpec((tm, E), lambda i, j: (i, 0)),
                scratch_shapes=[pltpu.VMEM((tm, E), jnp.float32)],
            ),
            compiler_params=pltpu.CompilerParams(
                dimension_semantics=("parallel", "arbitrary"),
                vmem_limit_bytes=vmem_limit,
            ),
            cost_estimate=cost,
        )(x2, w1, w2)

    return out[:M, :d_emb].reshape(B, S, d_emb)


def _reference(x, w_emb2ff, w_ff2emb):
    h = jax.nn.sigmoid(
        jnp.dot(x.astype(jnp.float32), jnp.transpose(w_emb2ff).astype(jnp.float32))
    ).astype(jnp.bfloat16)
    y = jax.nn.sigmoid(
        jnp.dot(h.astype(jnp.float32), jnp.transpose(w_ff2emb).astype(jnp.float32))
    ).astype(jnp.bfloat16)
    return y


if __name__ == "__main__":
    # Small shapes consistent with the module: d_emb (embedding_dimension), d_ff = 4*d_emb
    B, S, d_emb = 2, 8, 32
    d_ff = 4 * d_emb

    key = jax.random.PRNGKey(0)
    kx, k1, k2 = jax.random.split(key, 3)

    x = jax.random.normal(kx, (B, S, d_emb), dtype=jnp.float32).astype(jnp.bfloat16)
    # torch.nn.Linear weight shapes: (out_features, in_features)
    w_emb2ff = (jax.random.normal(k1, (d_ff, d_emb), dtype=jnp.float32)
                * (1.0 / jnp.sqrt(d_emb))).astype(jnp.bfloat16)
    w_ff2emb = (jax.random.normal(k2, (d_emb, d_ff), dtype=jnp.float32)
                * (1.0 / jnp.sqrt(d_ff))).astype(jnp.bfloat16)

    out = layer_forward(x, w_emb2ff, w_ff2emb)
    out = jax.block_until_ready(out)

    ref = _reference(x, w_emb2ff, w_ff2emb)
    assert out.shape == (B, S, d_emb) and out.dtype == jnp.bfloat16
    assert jnp.allclose(out.astype(jnp.float32), ref.astype(jnp.float32),
                        atol=2e-2, rtol=2e-2)
    print("KERNEL_OK")
</pallas_src>

<mosaic_0001>
module attributes {stable_mosaic.version = 11 : i64} {
  func.func @_mlp_kernel_single(%arg0: i32, %arg1: memref<16x128xbf16, #tpu.memory_space<vmem>>, %arg2: memref<128x128xbf16, #tpu.memory_space<vmem>>, %arg3: memref<128x128xbf16, #tpu.memory_space<vmem>>, %arg4: memref<16x128xbf16, #tpu.memory_space<vmem>>) attributes {dimension_semantics = [#tpu.dimension_semantics<parallel>], iteration_bounds = array<i64: 1>, scalar_prefetch = 0 : i64, scratch_operands = 0 : i64, tpu.core_type = #tpu.core_type<tc>, window_params = [{transform_indices = @transform_0, window_bounds = array<i64: 16, 128>}, {pipeline_mode = #tpu.pipeline_mode<synchronous>, transform_indices = @transform_1, window_bounds = array<i64: 128, 128>}, {pipeline_mode = #tpu.pipeline_mode<synchronous>, transform_indices = @transform_2, window_bounds = array<i64: 128, 128>}, {transform_indices = @transform_3, window_bounds = array<i64: 16, 128>}]} {
    %c0 = arith.constant 0 : index
    %c0_0 = arith.constant 0 : index
    %0 = vector.load %arg1[%c0, %c0_0] : memref<16x128xbf16, #tpu.memory_space<vmem>>, vector<16x128xbf16>
    %c0_1 = arith.constant 0 : index
    %c0_2 = arith.constant 0 : index
    %1 = vector.load %arg2[%c0_1, %c0_2] : memref<128x128xbf16, #tpu.memory_space<vmem>>, vector<128x128xbf16>
    %cst = arith.constant dense<0.000000e+00> : vector<16x128xf32>
    %2 = tpu.matmul %0, %1, %cst {dimension_numbers = #tpu.dot_dimension_numbers<[1], [1], [0], [0], [0, 0, 1, 0], [], []>} : vector<16x128xbf16>, vector<128x128xbf16>, vector<16x128xf32> -> vector<16x128xf32>
    %cst_3 = arith.constant 5.000000e-01 : f32
    %3 = vector.broadcast %cst_3 : f32 to vector<16x128xf32>
    %4 = arith.mulf %3, %2 : vector<16x128xf32>
    %5 = math.tanh %4 : vector<16x128xf32>
    %cst_4 = arith.constant 5.000000e-01 : f32
    %6 = vector.broadcast %cst_4 : f32 to vector<16x128xf32>
    %7 = arith.mulf %6, %5 : vector<16x128xf32>
    %cst_5 = arith.constant 5.000000e-01 : f32
    %8 = vector.broadcast %cst_5 : f32 to vector<16x128xf32>
    %9 = arith.addf %7, %8 : vector<16x128xf32>
    %10 = arith.truncf %9 : vector<16x128xf32> to vector<16x128xbf16>
    %c0_6 = arith.constant 0 : index
    %c0_7 = arith.constant 0 : index
    %11 = vector.load %arg3[%c0_6, %c0_7] : memref<128x128xbf16, #tpu.memory_space<vmem>>, vector<128x128xbf16>
    %cst_8 = arith.constant dense<0.000000e+00> : vector<16x128xf32>
    %12 = tpu.matmul %10, %11, %cst_8 {dimension_numbers = #tpu.dot_dimension_numbers<[1], [1], [0], [0], [0, 0, 1, 0], [], []>} : vector<16x128xbf16>, vector<128x128xbf16>, vector<16x128xf32> -> vector<16x128xf32>
    %cst_9 = arith.constant 5.000000e-01 : f32
    %13 = vector.broadcast %cst_9 : f32 to vector<16x128xf32>
    %14 = arith.mulf %13, %12 : vector<16x128xf32>
    %15 = math.tanh %14 : vector<16x128xf32>
    %cst_10 = arith.constant 5.000000e-01 : f32
    %16 = vector.broadcast %cst_10 : f32 to vector<16x128xf32>
    %17 = arith.mulf %16, %15 : vector<16x128xf32>
    %cst_11 = arith.constant 5.000000e-01 : f32
    %18 = vector.broadcast %cst_11 : f32 to vector<16x128xf32>
    %19 = arith.addf %17, %18 : vector<16x128xf32>
    %20 = arith.truncf %19 : vector<16x128xf32> to vector<16x128xbf16>
    %c0_12 = arith.constant 0 : index
    %c0_13 = arith.constant 0 : index
    %21 = vector.load %arg4[%c0_12, %c0_13] : memref<16x128xbf16, #tpu.memory_space<vmem>>, vector<16x128xbf16>
    tpu.vector_store %arg4[%c0_12, %c0_13], %20 {strides = array<i32>} : memref<16x128xbf16, #tpu.memory_space<vmem>>, vector<16x128xbf16>,
    return
  }
  func.func @transform_0(%arg0: i32) -> (i32, i32) {
    %c0_i32 = arith.constant 0 : i32
    %c0_i32_0 = arith.constant 0 : i32
    return %arg0, %c0_i32 : i32, i32
  }
  func.func @transform_1(%arg0: i32) -> (i32, i32) {
    %c0_i32 = arith.constant 0 : i32
    %c0_i32_0 = arith.constant 0 : i32
    %c0_i32_1 = arith.constant 0 : i32
    return %c0_i32, %c0_i32_0 : i32, i32
  }
  func.func @transform_2(%arg0: i32) -> (i32, i32) {
    %c0_i32 = arith.constant 0 : i32
    %c0_i32_0 = arith.constant 0 : i32
    %c0_i32_1 = arith.constant 0 : i32
    return %c0_i32, %c0_i32_0 : i32, i32
  }
  func.func @transform_3(%arg0: i32) -> (i32, i32) {
    %c0_i32 = arith.constant 0 : i32
    %c0_i32_0 = arith.constant 0 : i32
    return %arg0, %c0_i32 : i32, i32
  }
}

</mosaic_0001>

<llo_original>
// kernel: layer_forward.1
$region0: #{layer_forward.1}
  #allocation0 [shape = 'u32[]', space=smem, size = 0x4, offset = 0x4, fixed_abs, tag = 'smem constant byte address 0x4 - core index']
  #allocation1 [shape = 'u32[144,128]{1,0:T(1,128)}', space=vmem, size = 0x12000, scoped, tag = 'internal scratch']
  %s0 = inlined_call_operand.vmem [shape: bf16[16,128], index: 0, kind: input, shape index: {}]
  %s1 = inlined_call_operand.vmem [shape: bf16[128,128], index: 1, kind: input, shape index: {}]
  %s2 = inlined_call_operand.vmem [shape: bf16[128,128], index: 2, kind: input, shape index: {}]
  %s3 = inlined_call_operand.vmem [shape: bf16[16,128], index: 3, kind: output, shape index: {}]
  %s4 = sld [smem:[#allocation0]]
  $region22: #{layer_forward.1} parent=0
    _
  %s6 = ssub.s32 1, %s4
  %s7 = scalar_select 0, %s6, %s4
  // Predicated region
  $region2: #{layer_forward.1} parent=0 // pred_check
    _
  $region3: #{layer_forward.1} parent=0 // pred_check_branch
    %9 = sbr.rel (0) target = $region5
  $region4: #{layer_forward.1} parent=0 // pred_region
    _
  $region5: #{layer_forward.1} parent=0 // pred_fallthru
    _
  // Predicated region
  $region6: #{layer_forward.1} parent=0 // pred_check
    _
  $region7: #{layer_forward.1} parent=0 // pred_check_branch
    %11 = sbr.rel (0) target = $region9
  $region8: #{layer_forward.1} parent=0 // pred_region
    _
  $region9: #{layer_forward.1} parent=0 // pred_fallthru
    _
  // Predicated region
  $region10: #{layer_forward.1} parent=0 // pred_check
    _
  $region11: #{layer_forward.1} parent=0 // pred_check_branch
    %13 = sbr.rel (0) target = $region13
  $region12: #{layer_forward.1} parent=0 // pred_region
    _
  $region13: #{layer_forward.1} parent=0 // pred_fallthru
    _
  %v15 = vld [vmem:[%s0] sm:$0xf]
  %v16 = vld [vmem:[%s0 + $0x4] sm:$0xf]
  %v17 = vld [vmem:[%s1] sm:$0xf]
  %v18 = vld [vmem:[%s1 + $0x4] sm:$0xf]
  %v19 = vld [vmem:[%s1 + $0x8] sm:$0xf]
  %v20 = vld [vmem:[%s1 + $0xc] sm:$0xf]
  %v21 = vld [vmem:[%s1 + $0x10] sm:$0xf]
  %v22 = vld [vmem:[%s1 + $0x14] sm:$0xf]
  %v23 = vld [vmem:[%s1 + $0x18] sm:$0xf]
  %v24 = vld [vmem:[%s1 + $0x1c] sm:$0xf]
  %v25 = vld [vmem:[%s1 + $0x20] sm:$0xf]
  %v26 = vld [vmem:[%s1 + $0x24] sm:$0xf]
  %v27 = vld [vmem:[%s1 + $0x28] sm:$0xf]
  %v28 = vld [vmem:[%s1 + $0x2c] sm:$0xf]
  %v29 = vld [vmem:[%s1 + $0x30] sm:$0xf]
  %v30 = vld [vmem:[%s1 + $0x34] sm:$0xf]
  %v31 = vld [vmem:[%s1 + $0x38] sm:$0xf]
  %v32 = vld [vmem:[%s1 + $0x3c] sm:$0xf]
  %v35 = vunpack.c.l.b16 %v15
  %v36 = vunpack.c.l.b16 %v16
  %v37 = vpack.c.b16 %v36, %v35
  %v55 = vunpack.c.l.b16 %v17
  %v56 = vunpack.c.l.b16 %v18
  %v57 = vunpack.c.l.b16 %v19
  %v58 = vunpack.c.l.b16 %v20
  %v59 = vunpack.c.l.b16 %v21
  %v60 = vunpack.c.l.b16 %v22
  %v61 = vunpack.c.l.b16 %v23
  %v62 = vunpack.c.l.b16 %v24
  %v63 = vunpack.c.l.b16 %v25
  %v64 = vunpack.c.l.b16 %v26
  %v65 = vunpack.c.l.b16 %v27
  %v66 = vunpack.c.l.b16 %v28
  %v67 = vunpack.c.l.b16 %v29
  %v68 = vunpack.c.l.b16 %v30
  %v69 = vunpack.c.l.b16 %v31
  %v70 = vunpack.c.l.b16 %v32
  %v71 = vpack.c.b16 %v56, %v55
  %v72 = vpack.c.b16 %v58, %v57
  %v73 = vpack.c.b16 %v60, %v59
  %v74 = vpack.c.b16 %v62, %v61
  %v75 = vpack.c.b16 %v64, %v63
  %v76 = vpack.c.b16 %v66, %v65
  %v77 = vpack.c.b16 %v68, %v67
  %v78 = vpack.c.b16 %v70, %v69
  %87 = vmatprep.subr.bf16.mxu0 0
  %88 = vmatpush1.bf16.xpose.msra.mxu0 %v71
  %89 = vmatprep.subr.bf16.mxu0 0
  %90 = vmatpush1.bf16.xpose.msra.mxu0 %v72
  %91 = vmatprep.subr.bf16.mxu0 0
  %92 = vmatpush1.bf16.xpose.msra.mxu0 %v73
  %93 = vmatprep.subr.bf16.mxu0 0
  %94 = vmatpush1.bf16.xpose.msra.mxu0 %v74
  %95 = vmatprep.subr.bf16.mxu0 0
  %96 = vmatpush1.bf16.xpose.msra.mxu0 %v75
  %97 = vmatprep.subr.bf16.mxu0 0
  %98 = vmatpush1.bf16.xpose.msra.mxu0 %v76
  %99 = vmatprep.subr.bf16.mxu0 0
  %100 = vmatpush1.bf16.xpose.msra.mxu0 %v77
  %101 = vmatprep.subr.bf16.mxu0 0
  %102 = vmatpush1.bf16.xpose.msra.mxu0 %v78
  %103 = vmatprep.subr.bf16.mxu0 0
  %104 = vmatpush1.bf16.xpose.msra.mxu0 0
  %105 = vmatprep.subr.bf16.mxu0 0
  %106 = vmatpush1.bf16.xpose.msra.mxu0 0
  %107 = vmatprep.subr.bf16.mxu0 0
  %108 = vmatpush1.bf16.xpose.msra.mxu0 0
  %109 = vmatprep.subr.bf16.mxu0 0
  %110 = vmatpush1.bf16.xpose.msra.mxu0 0
  %111 = vmatprep.subr.bf16.mxu0 0
  %112 = vmatpush1.bf16.xpose.msra.mxu0 0
  %113 = vmatprep.subr.bf16.mxu0 0
  %114 = vmatpush1.bf16.xpose.msra.mxu0 0
  %115 = vmatprep.subr.bf16.mxu0 0
  %116 = vmatpush1.bf16.xpose.msra.mxu0 0
  %117 = vmatprep.subr.bf16.mxu0 0
  %118 = vmatpush1.bf16.xpose.msra.mxu0 0
  %119 = vmatprep.mubr.bf16.mxu0 0
  %120 = vmatmul.mubr.bf16.gmra.mrb[0].mxu0 %v37
  %v121 = vpop.f32.mrb[0].mxu0
  %v122 = vadd.f32 0.0, %v121
  %v123 = vpop.f32.mrb[0].mxu0
  %v124 = vpop.f32.mrb[0].mxu0
  %v125 = vadd.f32 0.0, %v124
  %v126 = vpop.f32.mrb[0].mxu0
  %127 = vdwg.mxu0
  %v128 = vmul.f32 %v122, 0.5
  %v129 = vmul.f32 %v125, 0.5
  %v130 = vtanh.pop %v128
  %v131 = vtanh.pop %v129
  %v132 = vmul.f32 %v130, 0.5
  %v133 = vmul.f32 %v131, 0.5
  %v134 = vadd.f32 %v132, 0.5
  %v135 = vadd.f32 %v133, 0.5
  %v136 = vpack.c.bf16 %v135, %v134
  %v137 = vld [vmem:[%s2] sm:$0xf]
  %v138 = vld [vmem:[%s2 + $0x4] sm:$0xf]
  %v139 = vld [vmem:[%s2 + $0x8] sm:$0xf]
  %v140 = vld [vmem:[%s2 + $0xc] sm:$0xf]
  %v141 = vld [vmem:[%s2 + $0x10] sm:$0xf]
  %v142 = vld [vmem:[%s2 + $0x14] sm:$0xf]
  %v143 = vld [vmem:[%s2 + $0x18] sm:$0xf]
  %v144 = vld [vmem:[%s2 + $0x1c] sm:$0xf]
  %v145 = vld [vmem:[%s2 + $0x20] sm:$0xf]
  %v146 = vld [vmem:[%s2 + $0x24] sm:$0xf]
  %v147 = vld [vmem:[%s2 + $0x28] sm:$0xf]
  %v148 = vld [vmem:[%s2 + $0x2c] sm:$0xf]
  %v149 = vld [vmem:[%s2 + $0x30] sm:$0xf]
  %v150 = vld [vmem:[%s2 + $0x34] sm:$0xf]
  %v151 = vld [vmem:[%s2 + $0x38] sm:$0xf]
  %v152 = vld [vmem:[%s2 + $0x3c] sm:$0xf]
  %v169 = vunpack.c.l.b16 %v137
  %v170 = vunpack.c.l.b16 %v138
  %v171 = vunpack.c.l.b16 %v139
  %v172 = vunpack.c.l.b16 %v140
  %v173 = vunpack.c.l.b16 %v141
  %v174 = vunpack.c.l.b16 %v142
  %v175 = vunpack.c.l.b16 %v143
  %v176 = vunpack.c.l.b16 %v144
  %v177 = vunpack.c.l.b16 %v145
  %v178 = vunpack.c.l.b16 %v146
  %v179 = vunpack.c.l.b16 %v147
  %v180 = vunpack.c.l.b16 %v148
  %v181 = vunpack.c.l.b16 %v149
  %v182 = vunpack.c.l.b16 %v150
  %v183 = vunpack.c.l.b16 %v151
  %v184 = vunpack.c.l.b16 %v152
  %v185 = vpack.c.b16 %v170, %v169
  %v186 = vpack.c.b16 %v172, %v171
  %v187 = vpack.c.b16 %v174, %v173
  %v188 = vpack.c.b16 %v176, %v175
  %v189 = vpack.c.b16 %v178, %v177
  %v190 = vpack.c.b16 %v180, %v179
  %v191 = vpack.c.b16 %v182, %v181
  %v192 = vpack.c.b16 %v184, %v183
  %201 = vmatprep.subr.bf16.mxu0 0
  %202 = vmatpush1.bf16.xpose.msra.mxu0 %v185
  %203 = vmatprep.subr.bf16.mxu0 0
  %204 = vmatpush1.bf16.xpose.msra.mxu0 %v186
  %205 = vmatprep.subr.bf16.mxu0 0
  %206 = vmatpush1.bf16.xpose.msra.mxu0 %v187
  %207 = vmatprep.subr.bf16.mxu0 0
  %208 = vmatpush1.bf16.xpose.msra.mxu0 %v188
  %209 = vmatprep.subr.bf16.mxu0 0
  %210 = vmatpush1.bf16.xpose.msra.mxu0 %v189
  %211 = vmatprep.subr.bf16.mxu0 0
  %212 = vmatpush1.bf16.xpose.msra.mxu0 %v190
  %213 = vmatprep.subr.bf16.mxu0 0
  %214 = vmatpush1.bf16.xpose.msra.mxu0 %v191
  %215 = vmatprep.subr.bf16.mxu0 0
  %216 = vmatpush1.bf16.xpose.msra.mxu0 %v192
  %217 = vmatprep.subr.bf16.mxu0 0
  %218 = vmatpush1.bf16.xpose.msra.mxu0 0
  %219 = vmatprep.subr.bf16.mxu0 0
  %220 = vmatpush1.bf16.xpose.msra.mxu0 0
  %221 = vmatprep.subr.bf16.mxu0 0
  %222 = vmatpush1.bf16.xpose.msra.mxu0 0
  %223 = vmatprep.subr.bf16.mxu0 0
  %224 = vmatpush1.bf16.xpose.msra.mxu0 0
  %225 = vmatprep.subr.bf16.mxu0 0
  %226 = vmatpush1.bf16.xpose.msra.mxu0 0
  %227 = vmatprep.subr.bf16.mxu0 0
  %228 = vmatpush1.bf16.xpose.msra.mxu0 0
  %229 = vmatprep.subr.bf16.mxu0 0
  %230 = vmatpush1.bf16.xpose.msra.mxu0 0
  %231 = vmatprep.subr.bf16.mxu0 0
  %232 = vmatpush1.bf16.xpose.msra.mxu0 0
  %233 = vmatprep.mubr.bf16.mxu0 0
  %234 = vmatmul.mubr.bf16.gmra.mrb[0].mxu0 %v136
  %v235 = vpop.f32.mrb[0].mxu0
  %v236 = vadd.f32 0.0, %v235
  %v237 = vpop.f32.mrb[0].mxu0
  %v238 = vpop.f32.mrb[0].mxu0
  %v239 = vadd.f32 0.0, %v238
  %v240 = vpop.f32.mrb[0].mxu0
  %241 = vdwg.mxu0
  %v242 = vmul.f32 %v236, 0.5
  %v243 = vmul.f32 %v239, 0.5
  %v244 = vtanh.pop %v242
  %v245 = vtanh.pop %v243
  %v246 = vmul.f32 %v244, 0.5
  %v247 = vmul.f32 %v245, 0.5
  %v248 = vadd.f32 %v246, 0.5
  %v249 = vadd.f32 %v247, 0.5
  %v250 = vpack.c.bf16 %v249, %v248
  %v252 = vunpack.c.l.b16 %v250
  %v253 = vunpack.c.h.b16 %v250
  %v254 = vpack.c.b16 %v252, %v252
  %v255 = vpack.c.b16 %v253, %v253
  %258 = vst [vmem:[%s3] sm:$0xf] %v254
  %259 = vst [vmem:[%s3 + $0x4] sm:$0xf] %v255
  // Predicated region
  $region14: #{layer_forward.1} parent=0 // pred_check
    _
  $region15: #{layer_forward.1} parent=0 // pred_check_branch
    %261 = sbr.rel (0) target = $region17
  $region16: #{layer_forward.1} parent=0 // pred_region
    _
  $region17: #{layer_forward.1} parent=0 // pred_fallthru
    _
  // Predicated region
  $region18: #{layer_forward.1} parent=0 // pred_check
    _
  $region19: #{layer_forward.1} parent=0 // pred_check_branch
    %263 = sbr.rel (0) target = $region21
  $region20: #{layer_forward.1} parent=0 // pred_region
    _
  $region21: #{layer_forward.1} parent=0 // pred_fallthru
    _

</llo_original>
